<compile_context>
chip_gen: v6e
topology: v6e:2x2x1
jax: 0.10.0
libtpu: 0.0.40
codegen_flags: <defaults>
</compile_context>

<pallas_src>
import functools

import jax
import jax.numpy as jnp
import numpy as np
from jax.experimental import pallas as pl
from jax.experimental.pallas import tpu as pltpu


def _round_up(x, m):
    return ((x + m - 1) // m) * m


# ---------------------------------------------------------------------------
# Pallas kernel: one (B_TILE, TILE_N, T_pad) cost block.
# ---------------------------------------------------------------------------
def _cost_kernel(logits_ref, out_bbox_ref, onehot_ref, tgt_bbox_ref, c_ref,
                 *, w_class, w_bbox, w_giou):
    # ---- softmax (no per-element divide) + class gather via MXU matmul ------
    logits = logits_ref[...]                                    # (B, N, C_pad)
    m = jnp.max(logits, axis=-1, keepdims=True)
    e = jnp.exp(logits - m)                                     # (B, N, C_pad)
    # Fold (-w_class / rowsum) into one per-row scale so the final combine
    # needs no extra (N, T)-sized negate / weight multiply (VALU is binding).
    row_scale = (-w_class) * pl.reciprocal(
        jnp.sum(e, axis=-1, keepdims=True), approx=True)        # (B, N, 1) EUP
    # -w_class * prob[:, tgt_ids] == (e @ one_hot) * row_scale
    class_term = jnp.einsum(
        'bnc,bct->bnt', e, onehot_ref[...],
        preferred_element_type=jnp.float32) * row_scale         # (B, N, T)

    # ---- box costs ----------------------------------------------------------
    # TODO(synk): on v6e/v7x this elementwise chain can run in bf16 for ~2x the
    #             binding VALU slot; kept f32 so the same kernel is optimal/
    #             correct on v5e as well.
    ob = out_bbox_ref[...]        # (B, N, 4)   cxcywh predictions
    tbt = tgt_bbox_ref[...]       # (B, 4, T)   cxcywh targets (lane-dense)

    ocx, ocy = ob[..., 0:1], ob[..., 1:2]
    ow, oh = ob[..., 2:3], ob[..., 3:4]
    tcx, tcy = tbt[:, 0:1, :], tbt[:, 1:2, :]
    tw, th = tbt[:, 2:3, :], tbt[:, 3:4, :]

    # L1 cdist on raw cxcywh boxes
    cost_bbox = (jnp.abs(ocx - tcx) + jnp.abs(ocy - tcy)
                 + jnp.abs(ow - tw) + jnp.abs(oh - th))         # (B, N, T)

    # cxcywh -> xyxy
    ox1, oy1 = ocx - 0.5 * ow, ocy - 0.5 * oh
    ox2, oy2 = ocx + 0.5 * ow, ocy + 0.5 * oh
    tx1, ty1 = tcx - 0.5 * tw, tcy - 0.5 * th
    tx2, ty2 = tcx + 0.5 * tw, tcy + 0.5 * th

    area1 = ow * oh                                             # (B, N, 1)
    area2 = tw * th                                             # (B, 1, T)

    # intersection (keep clamps: boxes may not overlap)
    iw = jnp.maximum(jnp.minimum(ox2, tx2) - jnp.maximum(ox1, tx1), 0.0)
    ih = jnp.maximum(jnp.minimum(oy2, ty2) - jnp.maximum(oy1, ty1), 0.0)
    inter = iw * ih
    # eps keeps degenerate zero-area box pairs finite (avoids 0 * Inf -> NaN
    # through the approx reciprocals)
    union = area1 + area2 - inter + 1e-8

    # enclosing box extents are non-negative for well-formed (w, h >= 0) boxes
    ew = jnp.maximum(ox2, tx2) - jnp.minimum(ox1, tx1)
    eh = jnp.maximum(oy2, ty2) - jnp.minimum(oy1, ty1)
    enclose = ew * eh + 1e-8

    inv_u = pl.reciprocal(union, approx=True)                   # EUP
    inv_e = pl.reciprocal(enclose, approx=True)                 # EUP
    # giou = iou - (enclose - union)/enclose = inter/union - 1 + union/enclose
    giou = inter * inv_u - 1.0 + union * inv_e

    c_ref[...] = w_bbox * cost_bbox + class_term - w_giou * giou


# ---------------------------------------------------------------------------
# Wrapper: per-image padded cost blocks. Padding / transpose / one-hot glue in
# plain JAX, hot path in Pallas with a batch- and query-tiled parallel grid.
# ---------------------------------------------------------------------------
def compute_cost_matrices(pred_logits, pred_boxes, labels_padded, boxes_padded,
                          cost_class=1.0, cost_bbox=5.0, cost_giou=2.0,
                          tile_n=512, batch_tile=8):
    """Returns C of shape (bs, num_queries, T_pad); only the first sizes[b]
    target columns of image b are meaningful."""
    bs, nq, ncls = pred_logits.shape
    T_pad = int(labels_padded.shape[1])           # multiple of 128 (lane-dense)
    C_pad = _round_up(max(int(ncls), 128), 128)   # MXU-aligned class axis
    TILE_N = _round_up(min(int(tile_n), nq), 8)   # (8,128) constraint
    NQ_pad = _round_up(nq, TILE_N)
    n_q_tiles = NQ_pad // TILE_N

    # Batch-tile several images per grid step (amortize per-step overhead) but
    # keep >= 2 grid steps along the parallel axes (v7x has 2 TensorCores).
    max_bt = bs if n_q_tiles >= 2 else max(1, bs // 2)
    max_bt = max(1, min(int(batch_tile), max_bt))
    B_TILE = 1
    for d in range(1, bs + 1):
        if bs % d == 0 and d <= max_bt:
            B_TILE = d

    # Pad logits with a large negative value so padded classes / rows get ~zero
    # softmax mass and never produce NaN / overflow.
    logits_p = jnp.full((bs, NQ_pad, C_pad), -1e9, dtype=jnp.float32)
    logits_p = logits_p.at[:, :nq, :ncls].set(pred_logits.astype(jnp.float32))

    boxes_p = jnp.zeros((bs, NQ_pad, 4), dtype=jnp.float32)
    boxes_p = boxes_p.at[:, :nq, :].set(pred_boxes.astype(jnp.float32))

    # one-hot of padded labels (-1 fill -> all-zero column => zero class cost)
    onehot = jax.nn.one_hot(labels_padded, C_pad, dtype=jnp.float32)  # (bs,T,C)
    onehot_t = jnp.transpose(onehot, (0, 2, 1))                       # (bs,C,T)
    tgt_t = jnp.transpose(boxes_padded.astype(jnp.float32), (0, 2, 1))  # (bs,4,T)

    kernel = functools.partial(_cost_kernel,
                               w_class=float(cost_class),
                               w_bbox=float(cost_bbox),
                               w_giou=float(cost_giou))

    grid = (bs // B_TILE, n_q_tiles)
    C = pl.pallas_call(
        kernel,
        out_shape=jax.ShapeDtypeStruct((bs, NQ_pad, T_pad), jnp.float32),
        grid=grid,
        in_specs=[
            # per-tile predictions (pipelined over batch and query tiles)
            pl.BlockSpec((B_TILE, TILE_N, C_pad), lambda b, i: (b, i, 0)),
            pl.BlockSpec((B_TILE, TILE_N, 4),     lambda b, i: (b, i, 0)),
            # per-image targets: constant over the query-tile axis
            pl.BlockSpec((B_TILE, C_pad, T_pad),  lambda b, i: (b, 0, 0)),
            pl.BlockSpec((B_TILE, 4, T_pad),      lambda b, i: (b, 0, 0)),
        ],
        out_specs=pl.BlockSpec((B_TILE, TILE_N, T_pad), lambda b, i: (b, i, 0)),
        compiler_params=pltpu.CompilerParams(
            dimension_semantics=("parallel", "parallel"),
            vmem_limit_bytes=32 * 1024 * 1024),
    )(logits_p, boxes_p, onehot_t, tgt_t)

    return C[:, :nq, :]


# ---------------------------------------------------------------------------
# Host-side Hungarian assignment (no clean Pallas equivalent).
# TODO(synk): linear_sum_assignment is a sequential host-side algorithm; it is
#             not implemented as a TPU kernel.
# ---------------------------------------------------------------------------
def _linear_sum_assignment(cost):
    try:
        from scipy.optimize import linear_sum_assignment as lsa
        return lsa(cost)
    except Exception:
        # brute-force fallback for tiny problems (num_queries >= num_targets)
        import itertools
        n, m = cost.shape
        assert n >= m, "fallback assumes rows >= cols"
        best_cost, best_rows = None, None
        for rows in itertools.permutations(range(n), m):
            c = sum(cost[r, j] for j, r in enumerate(rows))
            if best_cost is None or c < best_cost:
                best_cost, best_rows = c, rows
        rows = np.asarray(best_rows)
        cols = np.arange(m)
        order = np.argsort(rows)
        return rows[order], cols[order]


def hungarian_matcher(outputs, targets,
                      cost_class=1.0, cost_bbox=5.0, cost_giou=2.0):
    sizes = [int(t["boxes"].shape[0]) for t in targets]
    bs = len(targets)
    max_sz = max(max(sizes), 1)
    T_pad = _round_up(max_sz, 128)               # lane-dense target axis

    labels_padded = np.full((bs, T_pad), -1, dtype=np.int32)
    boxes_padded = np.zeros((bs, T_pad, 4), dtype=np.float32)
    for b, t in enumerate(targets):
        labels_padded[b, :sizes[b]] = np.asarray(t["labels"])
        boxes_padded[b, :sizes[b], :] = np.asarray(t["boxes"])

    C = compute_cost_matrices(outputs["pred_logits"], outputs["pred_boxes"],
                              jnp.asarray(labels_padded),
                              jnp.asarray(boxes_padded),
                              cost_class=cost_class, cost_bbox=cost_bbox,
                              cost_giou=cost_giou)
    # device-side column crop: only ship the columns scipy actually needs
    C = np.asarray(jax.block_until_ready(C[:, :, :max_sz]))   # (bs, nq, max_sz)

    indices = []
    for b, sz in enumerate(sizes):
        i, j = _linear_sum_assignment(C[b, :, :sz])
        indices.append((np.asarray(i, dtype=np.int64),
                        np.asarray(j, dtype=np.int64)))
    return indices, C


# ---------------------------------------------------------------------------
# Pure-numpy reference for the cost matrix (mirrors the PyTorch math).
# ---------------------------------------------------------------------------
def _reference_cost(pred_logits, pred_boxes, tgt_ids, tgt_boxes,
                    cost_class=1.0, cost_bbox=5.0, cost_giou=2.0):
    bs, nq, ncls = pred_logits.shape
    logits = np.asarray(pred_logits, np.float64).reshape(bs * nq, ncls)
    out_bbox = np.asarray(pred_boxes, np.float64).reshape(bs * nq, 4)
    tgt_ids = np.asarray(tgt_ids)
    tgt_bbox = np.asarray(tgt_boxes, np.float64)

    e = np.exp(logits - logits.max(-1, keepdims=True))
    prob = e / e.sum(-1, keepdims=True)
    c_class = -prob[:, tgt_ids]
    c_bbox = np.abs(out_bbox[:, None, :] - tgt_bbox[None, :, :]).sum(-1)

    def cxcywh_to_xyxy(b):
        cx, cy, w, h = b[:, 0], b[:, 1], b[:, 2], b[:, 3]
        return np.stack([cx - 0.5 * w, cy - 0.5 * h,
                         cx + 0.5 * w, cy + 0.5 * h], axis=-1)

    b1 = cxcywh_to_xyxy(out_bbox)
    b2 = cxcywh_to_xyxy(tgt_bbox)
    a1 = (b1[:, 2] - b1[:, 0]) * (b1[:, 3] - b1[:, 1])
    a2 = (b2[:, 2] - b2[:, 0]) * (b2[:, 3] - b2[:, 1])
    lt = np.maximum(b1[:, None, :2], b2[None, :, :2])
    rb = np.minimum(b1[:, None, 2:], b2[None, :, 2:])
    wh = np.clip(rb - lt, 0, None)
    inter = wh[..., 0] * wh[..., 1]
    union = a1[:, None] + a2[None, :] - inter
    iou = inter / union
    lte = np.minimum(b1[:, None, :2], b2[None, :, :2])
    rbe = np.maximum(b1[:, None, 2:], b2[None, :, 2:])
    whe = np.clip(rbe - lte, 0, None)
    enc = whe[..., 0] * whe[..., 1]
    giou = iou - (enc - union) / enc
    c_giou = -giou

    C = cost_bbox * c_bbox + cost_class * c_class + cost_giou * c_giou
    return C.reshape(bs, nq, -1)


if __name__ == "__main__":
    key = jax.random.PRNGKey(0)
    bs, num_queries, num_classes = 2, 8, 32

    k1, k2, k3, k4, k5 = jax.random.split(key, 5)
    pred_logits = jax.random.normal(k1, (bs, num_queries, num_classes),
                                    dtype=jnp.float32)
    # pred boxes in cxcywh, all components in (0, 1) like DETR's sigmoid output
    pred_boxes = jax.nn.sigmoid(
        jax.random.normal(k2, (bs, num_queries, 4), dtype=jnp.float32))

    # synthetic targets: image 0 has 3 objects, image 1 has 4 objects
    sizes = [3, 4]
    targets = []
    kb, kl = k3, k4
    for sz in sizes:
        kb, kb1 = jax.random.split(kb)
        kl, kl1 = jax.random.split(kl)
        cxcy = jax.random.uniform(kb1, (sz, 2), minval=0.25, maxval=0.75)
        wh = jax.random.uniform(jax.random.fold_in(kb1, 7), (sz, 2),
                                minval=0.05, maxval=0.3)
        boxes = jnp.concatenate([cxcy, wh], axis=-1).astype(jnp.float32)
        labels = jax.random.randint(kl1, (sz,), 0, num_classes, dtype=jnp.int32)
        targets.append({"boxes": boxes, "labels": labels})

    outputs = {"pred_logits": pred_logits, "pred_boxes": pred_boxes}

    indices, C = hungarian_matcher(outputs, targets)

    # correctness check of the Pallas per-image cost blocks against a numpy
    # reference of the full cross-image matrix (block-diagonal slices).
    # Tolerance is loosened vs f64 since the kernel uses EUP approx reciprocals.
    tgt_ids = np.concatenate([np.asarray(t["labels"]) for t in targets])
    tgt_boxes = np.concatenate([np.asarray(t["boxes"]) for t in targets])
    C_ref = _reference_cost(np.asarray(pred_logits), np.asarray(pred_boxes),
                            tgt_ids, tgt_boxes)
    start = 0
    for b, sz in enumerate(sizes):
        np.testing.assert_allclose(C[b, :, :sz], C_ref[b, :, start:start + sz],
                                   rtol=1e-2, atol=1e-2)
        start += sz

    # sanity: indices are valid shapes / ranges
    for (i, j), t in zip(indices, targets):
        nt = t["boxes"].shape[0]
        assert i.shape == j.shape == (nt,)
        assert np.all((i >= 0) & (i < num_queries))
        assert np.all((j >= 0) & (j < nt))

    print("KERNEL_OK")
</pallas_src>

<mosaic_0001>
module attributes {stable_mosaic.version = 11 : i64} {
  func.func @_cost_kernel(%arg0: i32, %arg1: i32, %arg2: memref<1x8x128xf32, #tpu.memory_space<vmem>>, %arg3: memref<1x8x4xf32, #tpu.memory_space<vmem>>, %arg4: memref<1x128x128xf32, #tpu.memory_space<vmem>>, %arg5: memref<1x4x128xf32, #tpu.memory_space<vmem>>, %arg6: memref<1x8x128xf32, #tpu.memory_space<vmem>>) attributes {dimension_semantics = [#tpu.dimension_semantics<parallel>, #tpu.dimension_semantics<parallel>], iteration_bounds = array<i64: 2, 1>, scalar_prefetch = 0 : i64, scratch_operands = 0 : i64, tpu.core_type = #tpu.core_type<tc>, window_params = [{transform_indices = @transform_0, window_bounds = array<i64: 1, 8, 128>}, {transform_indices = @transform_1, window_bounds = array<i64: 1, 8, 4>}, {transform_indices = @transform_2, window_bounds = array<i64: 1, 128, 128>}, {transform_indices = @transform_3, window_bounds = array<i64: 1, 4, 128>}, {transform_indices = @transform_4, window_bounds = array<i64: 1, 8, 128>}]} {
    %c0 = arith.constant 0 : index
    %c0_0 = arith.constant 0 : index
    %c0_1 = arith.constant 0 : index
    %0 = vector.load %arg2[%c0, %c0_0, %c0_1] : memref<1x8x128xf32, #tpu.memory_space<vmem>>, vector<1x8x128xf32>
    %cst = arith.constant dense<0xFF800000> : vector<1x8xf32>
    %1 = vector.multi_reduction <maximumf>, %0, %cst [2] : vector<1x8x128xf32> to vector<1x8xf32>
    %2 = vector.shape_cast %1 : vector<1x8xf32> to vector<1x8x1xf32>
    %3 = vector.broadcast %2 : vector<1x8x1xf32> to vector<1x8x128xf32>
    %4 = arith.subf %0, %3 : vector<1x8x128xf32>
    %5 = math.exp %4 : vector<1x8x128xf32>
    %cst_2 = arith.constant dense<0.000000e+00> : vector<1x8xf32>
    %6 = vector.multi_reduction <add>, %5, %cst_2 [2] : vector<1x8x128xf32> to vector<1x8xf32>
    %7 = vector.shape_cast %6 : vector<1x8xf32> to vector<1x8x1xf32>
    %8 = tpu.reciprocal %7 {approx = true} : vector<1x8x1xf32> -> vector<1x8x1xf32>
    %cst_3 = arith.constant -1.000000e+00 : f32
    %9 = vector.broadcast %cst_3 : f32 to vector<1x8x1xf32>
    %10 = arith.mulf %9, %8 : vector<1x8x1xf32>
    %c0_4 = arith.constant 0 : index
    %c0_5 = arith.constant 0 : index
    %c0_6 = arith.constant 0 : index
    %11 = vector.load %arg4[%c0_4, %c0_5, %c0_6] : memref<1x128x128xf32, #tpu.memory_space<vmem>>, vector<1x128x128xf32>
    "tpu.trace_start"() <{level = 10 : i32, message = "bnc,bct->bnt"}> : () -> ()
    %cst_7 = arith.constant dense<0.000000e+00> : vector<1x8x128xf32>
    %12 = tpu.matmul %5, %11, %cst_7 {dimension_numbers = #tpu.dot_dimension_numbers<[2], [1], [1], [2], [0, 0, 0, 1, 1, 2], [0], [0]>} : vector<1x8x128xf32>, vector<1x128x128xf32>, vector<1x8x128xf32> -> vector<1x8x128xf32>
    "tpu.trace_stop"() : () -> ()
    %13 = vector.broadcast %10 : vector<1x8x1xf32> to vector<1x8x128xf32>
    %14 = arith.mulf %12, %13 : vector<1x8x128xf32>
    %c0_8 = arith.constant 0 : index
    %c0_9 = arith.constant 0 : index
    %c0_10 = arith.constant 0 : index
    %15 = vector.load %arg3[%c0_8, %c0_9, %c0_10] : memref<1x8x4xf32, #tpu.memory_space<vmem>>, vector<1x8x4xf32>
    %c0_11 = arith.constant 0 : index
    %c0_12 = arith.constant 0 : index
    %c0_13 = arith.constant 0 : index
    %16 = vector.load %arg5[%c0_11, %c0_12, %c0_13] : memref<1x4x128xf32, #tpu.memory_space<vmem>>, vector<1x4x128xf32>
    %17 = vector.extract_strided_slice %15 {offsets = [0, 0, 0], sizes = [1, 8, 1], strides = [1, 1, 1]} : vector<1x8x4xf32> to vector<1x8x1xf32>
    %18 = vector.extract_strided_slice %15 {offsets = [0, 0, 1], sizes = [1, 8, 1], strides = [1, 1, 1]} : vector<1x8x4xf32> to vector<1x8x1xf32>
    %19 = vector.extract_strided_slice %15 {offsets = [0, 0, 2], sizes = [1, 8, 1], strides = [1, 1, 1]} : vector<1x8x4xf32> to vector<1x8x1xf32>
    %20 = vector.extract_strided_slice %15 {offsets = [0, 0, 3], sizes = [1, 8, 1], strides = [1, 1, 1]} : vector<1x8x4xf32> to vector<1x8x1xf32>
    %21 = vector.extract_strided_slice %16 {offsets = [0, 0, 0], sizes = [1, 1, 128], strides = [1, 1, 1]} : vector<1x4x128xf32> to vector<1x1x128xf32>
    %22 = vector.extract_strided_slice %16 {offsets = [0, 1, 0], sizes = [1, 1, 128], strides = [1, 1, 1]} : vector<1x4x128xf32> to vector<1x1x128xf32>
    %23 = vector.extract_strided_slice %16 {offsets = [0, 2, 0], sizes = [1, 1, 128], strides = [1, 1, 1]} : vector<1x4x128xf32> to vector<1x1x128xf32>
    %24 = vector.extract_strided_slice %16 {offsets = [0, 3, 0], sizes = [1, 1, 128], strides = [1, 1, 1]} : vector<1x4x128xf32> to vector<1x1x128xf32>
    %25 = vector.broadcast %17 : vector<1x8x1xf32> to vector<1x8x128xf32>
    %26 = vector.broadcast %21 : vector<1x1x128xf32> to vector<1x8x128xf32>
    %27 = arith.subf %25, %26 : vector<1x8x128xf32>
    %28 = math.absf %27 : vector<1x8x128xf32>
    %29 = vector.broadcast %18 : vector<1x8x1xf32> to vector<1x8x128xf32>
    %30 = vector.broadcast %22 : vector<1x1x128xf32> to vector<1x8x128xf32>
    %31 = arith.subf %29, %30 : vector<1x8x128xf32>
    %32 = math.absf %31 : vector<1x8x128xf32>
    %33 = arith.addf %28, %32 : vector<1x8x128xf32>
    %34 = vector.broadcast %19 : vector<1x8x1xf32> to vector<1x8x128xf32>
    %35 = vector.broadcast %23 : vector<1x1x128xf32> to vector<1x8x128xf32>
    %36 = arith.subf %34, %35 : vector<1x8x128xf32>
    %37 = math.absf %36 : vector<1x8x128xf32>
    %38 = arith.addf %33, %37 : vector<1x8x128xf32>
    %39 = vector.broadcast %20 : vector<1x8x1xf32> to vector<1x8x128xf32>
    %40 = vector.broadcast %24 : vector<1x1x128xf32> to vector<1x8x128xf32>
    %41 = arith.subf %39, %40 : vector<1x8x128xf32>
    %42 = math.absf %41 : vector<1x8x128xf32>
    %43 = arith.addf %38, %42 : vector<1x8x128xf32>
    %cst_14 = arith.constant 5.000000e-01 : f32
    %44 = vector.broadcast %cst_14 : f32 to vector<1x8x1xf32>
    %45 = arith.mulf %44, %19 : vector<1x8x1xf32>
    %46 = arith.subf %17, %45 : vector<1x8x1xf32>
    %cst_15 = arith.constant 5.000000e-01 : f32
    %47 = vector.broadcast %cst_15 : f32 to vector<1x8x1xf32>
    %48 = arith.mulf %47, %20 : vector<1x8x1xf32>
    %49 = arith.subf %18, %48 : vector<1x8x1xf32>
    %cst_16 = arith.constant 5.000000e-01 : f32
    %50 = vector.broadcast %cst_16 : f32 to vector<1x8x1xf32>
    %51 = arith.mulf %50, %19 : vector<1x8x1xf32>
    %52 = arith.addf %17, %51 : vector<1x8x1xf32>
    %cst_17 = arith.constant 5.000000e-01 : f32
    %53 = vector.broadcast %cst_17 : f32 to vector<1x8x1xf32>
    %54 = arith.mulf %53, %20 : vector<1x8x1xf32>
    %55 = arith.addf %18, %54 : vector<1x8x1xf32>
    %cst_18 = arith.constant 5.000000e-01 : f32
    %56 = vector.broadcast %cst_18 : f32 to vector<1x1x128xf32>
    %57 = arith.mulf %56, %23 : vector<1x1x128xf32>
    %58 = arith.subf %21, %57 : vector<1x1x128xf32>
    %cst_19 = arith.constant 5.000000e-01 : f32
    %59 = vector.broadcast %cst_19 : f32 to vector<1x1x128xf32>
    %60 = arith.mulf %59, %24 : vector<1x1x128xf32>
    %61 = arith.subf %22, %60 : vector<1x1x128xf32>
    %cst_20 = arith.constant 5.000000e-01 : f32
    %62 = vector.broadcast %cst_20 : f32 to vector<1x1x128xf32>
    %63 = arith.mulf %62, %23 : vector<1x1x128xf32>
    %64 = arith.addf %21, %63 : vector<1x1x128xf32>
    %cst_21 = arith.constant 5.000000e-01 : f32
    %65 = vector.broadcast %cst_21 : f32 to vector<1x1x128xf32>
    %66 = arith.mulf %65, %24 : vector<1x1x128xf32>
    %67 = arith.addf %22, %66 : vector<1x1x128xf32>
    %68 = arith.mulf %19, %20 : vector<1x8x1xf32>
    %69 = arith.mulf %23, %24 : vector<1x1x128xf32>
    %70 = vector.broadcast %52 : vector<1x8x1xf32> to vector<1x8x128xf32>
    %71 = vector.broadcast %64 : vector<1x1x128xf32> to vector<1x8x128xf32>
    %72 = arith.minimumf %70, %71 : vector<1x8x128xf32>
    %73 = vector.broadcast %46 : vector<1x8x1xf32> to vector<1x8x128xf32>
    %74 = vector.broadcast %58 : vector<1x1x128xf32> to vector<1x8x128xf32>
    %75 = arith.maximumf %73, %74 : vector<1x8x128xf32>
    %76 = arith.subf %72, %75 : vector<1x8x128xf32>
    %cst_22 = arith.constant 0.000000e+00 : f32
    %77 = vector.broadcast %cst_22 : f32 to vector<1x8x128xf32>
    %78 = arith.maximumf %76, %77 : vector<1x8x128xf32>
    %79 = vector.broadcast %55 : vector<1x8x1xf32> to vector<1x8x128xf32>
    %80 = vector.broadcast %67 : vector<1x1x128xf32> to vector<1x8x128xf32>
    %81 = arith.minimumf %79, %80 : vector<1x8x128xf32>
    %82 = vector.broadcast %49 : vector<1x8x1xf32> to vector<1x8x128xf32>
    %83 = vector.broadcast %61 : vector<1x1x128xf32> to vector<1x8x128xf32>
    %84 = arith.maximumf %82, %83 : vector<1x8x128xf32>
    %85 = arith.subf %81, %84 : vector<1x8x128xf32>
    %cst_23 = arith.constant 0.000000e+00 : f32
    %86 = vector.broadcast %cst_23 : f32 to vector<1x8x128xf32>
    %87 = arith.maximumf %85, %86 : vector<1x8x128xf32>
    %88 = arith.mulf %78, %87 : vector<1x8x128xf32>
    %89 = vector.broadcast %68 : vector<1x8x1xf32> to vector<1x8x128xf32>
    %90 = vector.broadcast %69 : vector<1x1x128xf32> to vector<1x8x128xf32>
    %91 = arith.addf %89, %90 : vector<1x8x128xf32>
    %92 = arith.subf %91, %88 : vector<1x8x128xf32>
    %cst_24 = arith.constant 9.99999993E-9 : f32
    %93 = vector.broadcast %cst_24 : f32 to vector<1x8x128xf32>
    %94 = arith.addf %92, %93 : vector<1x8x128xf32>
    %95 = vector.broadcast %52 : vector<1x8x1xf32> to vector<1x8x128xf32>
    %96 = vector.broadcast %64 : vector<1x1x128xf32> to vector<1x8x128xf32>
    %97 = arith.maximumf %95, %96 : vector<1x8x128xf32>
    %98 = vector.broadcast %46 : vector<1x8x1xf32> to vector<1x8x128xf32>
    %99 = vector.broadcast %58 : vector<1x1x128xf32> to vector<1x8x128xf32>
    %100 = arith.minimumf %98, %99 : vector<1x8x128xf32>
    %101 = arith.subf %97, %100 : vector<1x8x128xf32>
    %102 = vector.broadcast %55 : vector<1x8x1xf32> to vector<1x8x128xf32>
    %103 = vector.broadcast %67 : vector<1x1x128xf32> to vector<1x8x128xf32>
    %104 = arith.maximumf %102, %103 : vector<1x8x128xf32>
    %105 = vector.broadcast %49 : vector<1x8x1xf32> to vector<1x8x128xf32>
    %106 = vector.broadcast %61 : vector<1x1x128xf32> to vector<1x8x128xf32>
    %107 = arith.minimumf %105, %106 : vector<1x8x128xf32>
    %108 = arith.subf %104, %107 : vector<1x8x128xf32>
    %109 = arith.mulf %101, %108 : vector<1x8x128xf32>
    %cst_25 = arith.constant 9.99999993E-9 : f32
    %110 = vector.broadcast %cst_25 : f32 to vector<1x8x128xf32>
    %111 = arith.addf %109, %110 : vector<1x8x128xf32>
    %112 = tpu.reciprocal %94 {approx = true} : vector<1x8x128xf32> -> vector<1x8x128xf32>
    %113 = tpu.reciprocal %111 {approx = true} : vector<1x8x128xf32> -> vector<1x8x128xf32>
    %114 = arith.mulf %88, %112 : vector<1x8x128xf32>
    %cst_26 = arith.constant 1.000000e+00 : f32
    %115 = vector.broadcast %cst_26 : f32 to vector<1x8x128xf32>
    %116 = arith.subf %114, %115 : vector<1x8x128xf32>
    %117 = arith.mulf %94, %113 : vector<1x8x128xf32>
    %118 = arith.addf %116, %117 : vector<1x8x128xf32>
    %cst_27 = arith.constant 5.000000e+00 : f32
    %119 = vector.broadcast %cst_27 : f32 to vector<1x8x128xf32>
    %120 = arith.mulf %119, %43 : vector<1x8x128xf32>
    %121 = arith.addf %120, %14 : vector<1x8x128xf32>
    %cst_28 = arith.constant 2.000000e+00 : f32
    %122 = vector.broadcast %cst_28 : f32 to vector<1x8x128xf32>
    %123 = arith.mulf %122, %118 : vector<1x8x128xf32>
    %124 = arith.subf %121, %123 : vector<1x8x128xf32>
    %c0_29 = arith.constant 0 : index
    %c0_30 = arith.constant 0 : index
    %c0_31 = arith.constant 0 : index
    %125 = vector.load %arg6[%c0_29, %c0_30, %c0_31] : memref<1x8x128xf32, #tpu.memory_space<vmem>>, vector<1x8x128xf32>
    tpu.vector_store %arg6[%c0_29, %c0_30, %c0_31], %124 {strides = array<i32>} : memref<1x8x128xf32, #tpu.memory_space<vmem>>, vector<1x8x128xf32>,
    return
  }
  func.func @transform_0(%arg0: i32, %arg1: i32) -> (i32, i32, i32) {
    %c0_i32 = arith.constant 0 : i32
    %c0_i32_0 = arith.constant 0 : i32
    return %arg0, %arg1, %c0_i32 : i32, i32, i32
  }
  func.func @transform_1(%arg0: i32, %arg1: i32) -> (i32, i32, i32) {
    %c0_i32 = arith.constant 0 : i32
    %c0_i32_0 = arith.constant 0 : i32
    return %arg0, %arg1, %c0_i32 : i32, i32, i32
  }
  func.func @transform_2(%arg0: i32, %arg1: i32) -> (i32, i32, i32) {
    %c0_i32 = arith.constant 0 : i32
    %c0_i32_0 = arith.constant 0 : i32
    %c0_i32_1 = arith.constant 0 : i32
    return %arg0, %c0_i32, %c0_i32_0 : i32, i32, i32
  }
  func.func @transform_3(%arg0: i32, %arg1: i32) -> (i32, i32, i32) {
    %c0_i32 = arith.constant 0 : i32
    %c0_i32_0 = arith.constant 0 : i32
    %c0_i32_1 = arith.constant 0 : i32
    return %arg0, %c0_i32, %c0_i32_0 : i32, i32, i32
  }
  func.func @transform_4(%arg0: i32, %arg1: i32) -> (i32, i32, i32) {
    %c0_i32 = arith.constant 0 : i32
    %c0_i32_0 = arith.constant 0 : i32
    return %arg0, %arg1, %c0_i32 : i32, i32, i32
  }
}

</mosaic_0001>

<llo_original>
// kernel: tpu_custom_call.1
$region0: #{tpu_custom_call.1}
  #allocation0 [shape = 'u32[]', space=smem, size = 0x4, offset = 0x4, fixed_abs, tag = 'smem constant byte address 0x4 - core index']
  #allocation1 [shape = 'u32[144,128]{1,0:T(1,128)}', space=vmem, size = 0x12000, scoped, tag = 'internal scratch']
  %s0 = inlined_call_operand.vmem [shape: f32[2,8,128], index: 0, kind: input, shape index: {}]
  %s1 = inlined_call_operand.vmem [shape: f32[2,8,4], index: 1, kind: input, shape index: {}]
  %s2 = inlined_call_operand.hbm [shape: f32[2,128,128], index: 2, kind: input, shape index: {}]
  %s3 = inlined_call_operand.vmem [shape: f32[2,4,128], index: 3, kind: input, shape index: {}]
  %s4 = inlined_call_operand.hbm [shape: f32[2,8,128], index: 4, kind: output, shape index: {}]
  %s5 = sld [smem:[#allocation0]]
  $region53: #{tpu_custom_call.1} parent=0
    _
  %s7 = ssub.s32 1, %s5
  %s8 = scalar_select 0, %s7, %s5
  $region1: #{tpu_custom_call.1} parent=0
    #allocation2 [shape = 'u8[131072]{0}', space=vmem, size = 0x20000, scoped, tag = 'input window, operand 2']
    #allocation3 [shape = 's32[2]{0}', space=sflag, size = 0x8, scoped, tag = 'scoped memory for tpu_custom_call.1']
    #allocation4 [shape = 's32[2]{0}', space=sflag, size = 0x8, scoped, tag = 'scoped memory for tpu_custom_call.1']
    #allocation5 [shape = 'u8[8192]{0}', space=vmem, size = 0x2000, scoped, tag = 'output window, operand 0']
    %9 = vsyncpa [#allocation3], 0
    %s10 = scalar_lea.sflag [#allocation3], 1
    %11 = vsyncpa %s10, 0
    %12 = vsyncpa [#allocation4], 0
    %s13 = scalar_lea.sflag [#allocation4], 1
    %14 = vsyncpa %s13, 0
    loop: start=0, step=1, limit=4
    $region2: #{tpu_custom_call.1} parent=1 // loop_pre_header
      _
    $region3: #{tpu_custom_call.1} parent=1 // loop_header
      %s16 = sphi 0, %s20
      %p17 = scmp.ge.s32.totalorder %s16, 4
      %s23 = sphi 0, %s35
      %s24 = sphi 0, %s31
      %s25 = sphi 0, %s23
      %s26 = sphi 0, %s24
      %s27 = sphi 0, %s25
      %s28 = sphi 0, %s26
      %s40 = sphi 0, %s42
      %s43 = sphi 0, %s40
      %s44 = sphi 0, %s43
      %s60 = sphi 0, %s44
      %s68 = sphi 0, %s70
      %s71 = sphi 0, %s68
      %s72 = sphi 0, %s71
      %s88 = sphi 0, %s72
      %s94 = sphi 0, %s96
      %s97 = sphi 0, %s94
      %s98 = sphi 0, %s97
      %s114 = sphi 0, %s98
      %s120 = sphi 0, %s122
      %s123 = sphi 0, %s120
      %s124 = sphi 0, %s123
      %s140 = sphi 0, %s124
      %s148 = sphi 0, %s150
      %s151 = sphi 0, %s148
      %s152 = sphi 0, %s151
      %s168 = sphi 0, %s152
    $region4: #{tpu_custom_call.1} parent=1 // loop_header_branch
      %19 = sbr.rel (%p17) target = $region8
    $region5: #{tpu_custom_call.1} parent=1 // loop_body
      %s21 = ssub.s32 %s16, 1
      %s22 = ssub.s32 %s16, 2
      %s29 = sadd.s32 1, %s24
      %p30 = scmp.ge.s32.totalorder %s29, 1
      %s31 = scalar_select %p30, 0, %s29
      %s32 = sadd.s32 1, %s23
      %s33 = scalar_select %p30, %s32, %s23
      %p34 = scmp.ge.s32.totalorder %s33, 2
      %s35 = scalar_select %p34, 0, %s33
      %s36 = ssub.s32 %s23, %s35
      %s37 = ssub.s32 %s24, %s31
      %s38 = sor.u32 %s36, %s37
      %p39 = scmp.eq.s32.totalorder %s38, 0
      %s41 = sadd.s32 %s40, 1
      %s42 = scalar_select %p39, %s40, %s41
      %p45 = pneg %p39
      %p46 = scmp.eq.s32.totalorder %s16, 1
      %p47 = por %p45, %p46
      %p48 = scmp.ne.s32.totalorder %s40, %s43
      %p49 = scmp.eq.s32.totalorder %s16, 0
      %p50 = por %p48, %p49
      %p51 = scmp.ne.s32.totalorder %s40, %s43
      %p52 = scmp.eq.s32.totalorder %s21, 1
      %p53 = por %p51, %p52
      %p54 = scmp.ne.s32.totalorder %s43, %s44
      %p55 = scmp.eq.s32.totalorder %s21, 0
      %p56 = por %p54, %p55
      %p57 = scmp.ne.s32.totalorder %s43, %s44
      %p58 = scmp.eq.s32.totalorder %s22, 1
      %p59 = por %p57, %p58
      %p61 = scmp.ne.s32.totalorder %s44, %s60
      %p62 = scmp.eq.s32.totalorder %s22, 0
      %p63 = por %p61, %p62
      %s64 = ssub.s32 %s23, %s35
      %s65 = ssub.s32 %s24, %s31
      %s66 = sor.u32 %s64, %s65
      %p67 = scmp.eq.s32.totalorder %s66, 0
      %s69 = sadd.s32 %s68, 1
      %s70 = scalar_select %p67, %s68, %s69
      %p73 = pneg %p67
      %p74 = scmp.eq.s32.totalorder %s16, 1
      %p75 = por %p73, %p74
      %p76 = scmp.ne.s32.totalorder %s68, %s71
      %p77 = scmp.eq.s32.totalorder %s16, 0
      %p78 = por %p76, %p77
      %p79 = scmp.ne.s32.totalorder %s68, %s71
      %p80 = scmp.eq.s32.totalorder %s21, 1
      %p81 = por %p79, %p80
      %p82 = scmp.ne.s32.totalorder %s71, %s72
      %p83 = scmp.eq.s32.totalorder %s21, 0
      %p84 = por %p82, %p83
      %p85 = scmp.ne.s32.totalorder %s71, %s72
      %p86 = scmp.eq.s32.totalorder %s22, 1
      %p87 = por %p85, %p86
      %p89 = scmp.ne.s32.totalorder %s72, %s88
      %p90 = scmp.eq.s32.totalorder %s22, 0
      %p91 = por %p89, %p90
      %s92 = ssub.s32 %s23, %s35
      %p93 = scmp.eq.s32.totalorder %s92, 0
      %s95 = sadd.s32 %s94, 1
      %s96 = scalar_select %p93, %s94, %s95
      %p99 = pneg %p93
      %p100 = scmp.eq.s32.totalorder %s16, 1
      %p101 = por %p99, %p100
      %p102 = scmp.ne.s32.totalorder %s94, %s97
      %p103 = scmp.eq.s32.totalorder %s16, 0
      %p104 = por %p102, %p103
      %p105 = scmp.ne.s32.totalorder %s94, %s97
      %p106 = scmp.eq.s32.totalorder %s21, 1
      %p107 = por %p105, %p106
      %p108 = scmp.ne.s32.totalorder %s97, %s98
      %p109 = scmp.eq.s32.totalorder %s21, 0
      %p110 = por %p108, %p109
      %p111 = scmp.ne.s32.totalorder %s97, %s98
      %p112 = scmp.eq.s32.totalorder %s22, 1
      %p113 = por %p111, %p112
      %p115 = scmp.ne.s32.totalorder %s98, %s114
      %p116 = scmp.eq.s32.totalorder %s22, 0
      %p117 = por %p115, %p116
      %s118 = ssub.s32 %s23, %s35
      %p119 = scmp.eq.s32.totalorder %s118, 0
      %s121 = sadd.s32 %s120, 1
      %s122 = scalar_select %p119, %s120, %s121
      %p125 = pneg %p119
      %p126 = scmp.eq.s32.totalorder %s16, 1
      %p127 = por %p125, %p126
      %p128 = scmp.ne.s32.totalorder %s120, %s123
      %p129 = scmp.eq.s32.totalorder %s16, 0
      %p130 = por %p128, %p129
      %p131 = scmp.ne.s32.totalorder %s120, %s123
      %p132 = scmp.eq.s32.totalorder %s21, 1
      %p133 = por %p131, %p132
      %p134 = scmp.ne.s32.totalorder %s123, %s124
      %p135 = scmp.eq.s32.totalorder %s21, 0
      %p136 = por %p134, %p135
      %p137 = scmp.ne.s32.totalorder %s123, %s124
      %p138 = scmp.eq.s32.totalorder %s22, 1
      %p139 = por %p137, %p138
      %p141 = scmp.ne.s32.totalorder %s124, %s140
      %p142 = scmp.eq.s32.totalorder %s22, 0
      %p143 = por %p141, %p142
      %s144 = ssub.s32 %s23, %s35
      %s145 = ssub.s32 %s24, %s31
      %s146 = sor.u32 %s144, %s145
      %p147 = scmp.eq.s32.totalorder %s146, 0
      %s149 = sadd.s32 %s148, 1
      %s150 = scalar_select %p147, %s148, %s149
      %p153 = pneg %p147
      %p154 = scmp.eq.s32.totalorder %s16, 1
      %p155 = por %p153, %p154
      %p156 = scmp.ne.s32.totalorder %s148, %s151
      %p157 = scmp.eq.s32.totalorder %s16, 0
      %p158 = por %p156, %p157
      %p159 = scmp.ne.s32.totalorder %s148, %s151
      %p160 = scmp.eq.s32.totalorder %s21, 1
      %p161 = por %p159, %p160
      %p162 = scmp.ne.s32.totalorder %s151, %s152
      %p163 = scmp.eq.s32.totalorder %s21, 0
      %p164 = por %p162, %p163
      %p165 = scmp.ne.s32.totalorder %s151, %s152
      %p166 = scmp.eq.s32.totalorder %s22, 1
      %p167 = por %p165, %p166
      %p169 = scmp.ne.s32.totalorder %s152, %s168
      %p170 = scmp.eq.s32.totalorder %s22, 0
      %p171 = por %p169, %p170
      %p172 = scmp.le.s32.totalorder 1, %s16
      %p173 = scmp.lt.s32.totalorder %s16, 3
      %p174 = pnand %p172, %p173
      %p175 = pneg %p174
      // Predicated region
      $region9: #{tpu_custom_call.1} parent=5 // pred_check
        _
      $region10: #{tpu_custom_call.1} parent=5 // pred_check_branch
        %177 = sbr.rel (%p174) target = $region12
      $region11: #{tpu_custom_call.1} parent=5 // pred_region
        %s178 = ssub.s32 %s16, 1
      $region12: #{tpu_custom_call.1} parent=5 // pred_fallthru
        _
      %p179 = scmp.lt.s32.totalorder %s16, 2
      // Predicated region
      $region13: #{tpu_custom_call.1} parent=5 // pred_check
        %p180 = pneg %p179
      $region14: #{tpu_custom_call.1} parent=5 // pred_check_branch
        %182 = sbr.rel (%p180) target = $region16
      $region15: #{tpu_custom_call.1} parent=5 // pred_region
        // Predicated region
        $region17: #{tpu_custom_call.1} parent=15 // pred_check
          %p183 = pneg %p50
        $region18: #{tpu_custom_call.1} parent=15 // pred_check_branch
          %185 = sbr.rel (%p183) target = $region20
        $region19: #{tpu_custom_call.1} parent=15 // pred_region
          %p186 = scmp.lt.s32.totalorder %s23, 1
          %s187 = scalar_select %p186, %s23, 1
          %p188 = scmp.lt.s32.totalorder %s24, 0
          %s189 = scalar_select %p188, %s24, 0
          %s190 = sadd.s32 %s189, %s187
          %s191 = smul.addr %s190, 8
          %s192 = scalar_lea.vmem %s0, %s191
        $region20: #{tpu_custom_call.1} parent=15 // pred_fallthru
          _
        // Predicated region
        $region21: #{tpu_custom_call.1} parent=15 // pred_check
          %p193 = pneg %p78
        $region22: #{tpu_custom_call.1} parent=15 // pred_check_branch
          %195 = sbr.rel (%p193) target = $region24
        $region23: #{tpu_custom_call.1} parent=15 // pred_region
          %p196 = scmp.lt.s32.totalorder %s23, 1
          %s197 = scalar_select %p196, %s23, 1
          %p198 = scmp.lt.s32.totalorder %s24, 0
          %s199 = scalar_select %p198, %s24, 0
          %s200 = sadd.s32 %s199, %s197
          %s201 = smul.addr %s200, 8
          %s202 = scalar_lea.vmem %s1, %s201
        $region24: #{tpu_custom_call.1} parent=15 // pred_fallthru
          _
        // Predicated region
        $region25: #{tpu_custom_call.1} parent=15 // pred_check
          %p203 = pneg %p104
        $region26: #{tpu_custom_call.1} parent=15 // pred_check_branch
          %205 = sbr.rel (%p203) target = $region28
        $region27: #{tpu_custom_call.1} parent=15 // pred_region
          %s206 = sand.u32 %s94, 1
          %s207 = scalar_lea.sflag [#allocation3], %s206
          %s208 = sand.u32 %s94, 1
          %s209 = smul.addr %s208, 128
          %s210 = scalar_lea.vmem [#allocation2], %s209
          %s212 = ssub.s32 2048, 2048
          %213 = vsyncadd %s207, %s212
          %s214 = smul.addr %s23, 16
          %s215 = smul.addr %s214, 128
          %s216 = scalar_lea.hbm %s2, %s215
          %s217 = sshll.u32 %s210, 4
          %s218 = int_to_ptr.vmem [resolvable:$true] %s217
          %223 = dma.hbm_to_vmem [thread:$0]  %s216, 2048, %s218, %s207, 128, 128, 8
        $region28: #{tpu_custom_call.1} parent=15 // pred_fallthru
          _
        // Predicated region
        $region29: #{tpu_custom_call.1} parent=15 // pred_check
          %p224 = pneg %p130
        $region30: #{tpu_custom_call.1} parent=15 // pred_check_branch
          %226 = sbr.rel (%p224) target = $region32
        $region31: #{tpu_custom_call.1} parent=15 // pred_region
          %p227 = scmp.lt.s32.totalorder %s23, 1
          %s228 = scalar_select %p227, %s23, 1
          %s229 = smul.addr %s228, 4
          %s230 = scalar_lea.vmem %s3, %s229
        $region32: #{tpu_custom_call.1} parent=15 // pred_fallthru
          _
      $region16: #{tpu_custom_call.1} parent=5 // pred_fallthru
        _
      %p231 = scmp.le.s32.totalorder 1, %s16
      %p232 = scmp.lt.s32.totalorder %s16, 3
      %p233 = pnand %p231, %p232
      %p234 = pneg %p233
      // Predicated region
      $region33: #{tpu_custom_call.1} parent=5 // pred_check
        _
      $region34: #{tpu_custom_call.1} parent=5 // pred_check_branch
        %236 = sbr.rel (%p233) target = $region36
      $region35: #{tpu_custom_call.1} parent=5 // pred_region
        %s237 = ssub.s32 %s16, 1
        %s238 = sand.u32 %s97, 1
        %s239 = scalar_lea.sflag [#allocation3], %s238
        %s240 = sand.u32 %s97, 1
        %s241 = smul.addr %s240, 128
        %s242 = scalar_lea.vmem [#allocation2], %s241
        // Predicated region
        $region37: #{tpu_custom_call.1} parent=35 // pred_check
          %p243 = pneg %p110
        $region38: #{tpu_custom_call.1} parent=35 // pred_check_branch
          %245 = sbr.rel (%p243) target = $region40
        $region39: #{tpu_custom_call.1} parent=35 // pred_region
          %246 = dma.done %s239, 2048
        $region40: #{tpu_custom_call.1} parent=35 // pred_fallthru
          _
        %p247 = scmp.lt.s32.totalorder %s25, 1
        %s248 = scalar_select %p247, %s25, 1
        %p249 = scmp.lt.s32.totalorder %s26, 0
        %s250 = scalar_select %p249, %s26, 0
        %s251 = sadd.s32 %s250, %s248
        %s252 = smul.addr %s251, 8
        %s253 = scalar_lea.vmem %s0, %s252
        %p254 = pneg %p56
        %p255 = pneg %p53
        %p256 = scmp.lt.s32.totalorder %s25, 1
        %s257 = scalar_select %p256, %s25, 1
        %p258 = scmp.lt.s32.totalorder %s26, 0
        %s259 = scalar_select %p258, %s26, 0
        %s260 = sadd.s32 %s259, %s257
        %s261 = smul.addr %s260, 8
        %s262 = scalar_lea.vmem %s1, %s261
        %p263 = pneg %p84
        %p264 = pneg %p81
        %s265 = sand.u32 %s97, 1
        %s266 = scalar_lea.sflag [#allocation3], %s265
        %s267 = sand.u32 %s97, 1
        %s268 = smul.addr %s267, 128
        %s269 = scalar_lea.vmem [#allocation2], %s268
        %p270 = pneg %p110
        %p271 = pneg %p107
        %p272 = scmp.lt.s32.totalorder %s25, 1
        %s273 = scalar_select %p272, %s25, 1
        %s274 = smul.addr %s273, 4
        %s275 = scalar_lea.vmem %s3, %s274
        %p276 = pneg %p136
        %p277 = pneg %p133
        %p278 = pneg %p164
        %p279 = pneg %p161
        %s280 = sand.u32 %s151, 1
        %s281 = scalar_lea.sflag [#allocation4], %s280
        %s282 = sand.u32 %s151, 1
        %s283 = smul.addr %s282, 8
        %s284 = scalar_lea.vmem [#allocation5], %s283
        %p285 = scmp.lt.s32.totalorder %s25, 1
        %s286 = scalar_select %p285, %s25, 1
        %p287 = scmp.lt.s32.totalorder %s26, 0
        %s288 = scalar_select %p287, %s26, 0
        %s289 = sadd.s32 %s288, %s286
        %s290 = smul.addr %s289, 8
        %s291 = scalar_lea.vmem %s0, %s290
        %p292 = scmp.lt.s32.totalorder %s25, 1
        %s293 = scalar_select %p292, %s25, 1
        %p294 = scmp.lt.s32.totalorder %s26, 0
        %s295 = scalar_select %p294, %s26, 0
        %s296 = sadd.s32 %s295, %s293
        %s297 = smul.addr %s296, 8
        %s298 = scalar_lea.vmem %s1, %s297
        %p299 = scmp.lt.s32.totalorder %s25, 1
        %s300 = scalar_select %p299, %s25, 1
        %s301 = smul.addr %s300, 4
        %s302 = scalar_lea.vmem %s3, %s301
        %v303 = vld [vmem:[%s291] sm:$0xff]
        %304 = vmax.xlane.f32.xlu0 %v303
        %v305 = vpop.xlane.xlu0 %304
        %v306 = vsub.f32 %v303, %v305
        %v307 = vmul.f32 %v306, 1.442695
        %v308 = vpow.pop %v307
        %309 = vadd.xlane.f32.xlu0 %v308
        %v310 = vpop.xlane.xlu0 %309
        %v311 = vrcp.pop %v310
        %v312 = vmul.f32 %v311, -1.0
        %v313 = vld [vmem:[%s242] sm:$0xff]
        %v314 = vld [vmem:[%s242 + $0x8] sm:$0xff]
        %v315 = vld [vmem:[%s242 + $0x10] sm:$0xff]
        %v316 = vld [vmem:[%s242 + $0x18] sm:$0xff]
        %v317 = vld [vmem:[%s242 + $0x20] sm:$0xff]
        %v318 = vld [vmem:[%s242 + $0x28] sm:$0xff]
        %v319 = vld [vmem:[%s242 + $0x30] sm:$0xff]
        %v320 = vld [vmem:[%s242 + $0x38] sm:$0xff]
        %v321 = vld [vmem:[%s242 + $0x40] sm:$0xff]
        %v322 = vld [vmem:[%s242 + $0x48] sm:$0xff]
        %v323 = vld [vmem:[%s242 + $0x50] sm:$0xff]
        %v324 = vld [vmem:[%s242 + $0x58] sm:$0xff]
        %v325 = vld [vmem:[%s242 + $0x60] sm:$0xff]
        %v326 = vld [vmem:[%s242 + $0x68] sm:$0xff]
        %v327 = vld [vmem:[%s242 + $0x70] sm:$0xff]
        %v328 = vld [vmem:[%s242 + $0x78] sm:$0xff]
        %329 = vmatprep.subr.mxu0 0.0
        %330 = vmatpush1.msra.mxu0 %v328
        %331 = vmatprep.subr.mxu0 0.0
        %332 = vmatpush1.msra.mxu0 %v327
        %333 = vmatprep.subr.mxu0 0.0
        %334 = vmatpush1.msra.mxu0 %v326
        %335 = vmatprep.subr.mxu0 0.0
        %336 = vmatpush1.msra.mxu0 %v325
        %337 = vmatprep.subr.mxu0 0.0
        %338 = vmatpush1.msra.mxu0 %v324
        %339 = vmatprep.subr.mxu0 0.0
        %340 = vmatpush1.msra.mxu0 %v323
        %341 = vmatprep.subr.mxu0 0.0
        %342 = vmatpush1.msra.mxu0 %v322
        %343 = vmatprep.subr.mxu0 0.0
        %344 = vmatpush1.msra.mxu0 %v321
        %345 = vmatprep.subr.mxu0 0.0
        %346 = vmatpush1.msra.mxu0 %v320
        %347 = vmatprep.subr.mxu0 0.0
        %348 = vmatpush1.msra.mxu0 %v319
        %349 = vmatprep.subr.mxu0 0.0
        %350 = vmatpush1.msra.mxu0 %v318
        %351 = vmatprep.subr.mxu0 0.0
        %352 = vmatpush1.msra.mxu0 %v317
        %353 = vmatprep.subr.mxu0 0.0
        %354 = vmatpush1.msra.mxu0 %v316
        %355 = vmatprep.subr.mxu0 0.0
        %356 = vmatpush1.msra.mxu0 %v315
        %357 = vmatprep.subr.mxu0 0.0
        %358 = vmatpush1.msra.mxu0 %v314
        %359 = vmatprep.subr.mxu0 0.0
        %360 = vmatpush1.msra.mxu0 %v313
        %361 = vmatprep.subr.mxu0 0.0
        %362 = vmatpush2.msra.mxu0 0.0
        %363 = vmatprep.subr.mxu0 0.0
        %364 = vmatpush2.msra.mxu0 0.0
        %365 = vmatprep.subr.mxu0 0.0
        %366 = vmatpush2.msra.mxu0 0.0
        %367 = vmatprep.subr.mxu0 0.0
        %368 = vmatpush2.msra.mxu0 0.0
        %369 = vmatprep.subr.mxu0 0.0
        %370 = vmatpush2.msra.mxu0 0.0
        %371 = vmatprep.subr.mxu0 0.0
        %372 = vmatpush2.msra.mxu0 0.0
        %373 = vmatprep.subr.mxu0 0.0
        %374 = vmatpush2.msra.mxu0 0.0
        %375 = vmatprep.subr.mxu0 0.0
        %376 = vmatpush2.msra.mxu0 0.0
        %377 = vmatprep.subr.mxu0 0.0
        %378 = vmatpush2.msra.mxu0 0.0
        %379 = vmatprep.subr.mxu0 0.0
        %380 = vmatpush2.msra.mxu0 0.0
        %381 = vmatprep.subr.mxu0 0.0
        %382 = vmatpush2.msra.mxu0 0.0
        %383 = vmatprep.subr.mxu0 0.0
        %384 = vmatpush2.msra.mxu0 0.0
        %385 = vmatprep.subr.mxu0 0.0
        %386 = vmatpush2.msra.mxu0 0.0
        %387 = vmatprep.subr.mxu0 0.0
        %388 = vmatpush2.msra.mxu0 0.0
        %389 = vmatprep.subr.mxu0 0.0
        %390 = vmatpush2.msra.mxu0 0.0
        %391 = vmatprep.subr.mxu0 0.0
        %392 = vmatpush2.msra.mxu0 0.0
        %393 = vmatprep.mubr.f32.mxu0 0.0
        %394 = vmatmul.mubr.f32.gmra.mxu0 %v308
        %v395 = vpop.f32.mrf.mxu0
        %v396 = vadd.f32 0.0, %v395
        %v397 = vpop.f32.mrf.mxu0
        %398 = vdwg.mxu0
        %v399 = vmul.f32 %v396, %v312
        %v400 = vld [vmem:[%s298] sm:$0xff]
        %v401 = vld [vmem:[%s302] sm:$0xf]
        %403 = vset.pattern.permute.xlu0 0
        %404 = vperm.xlu0 %403, %v400
        %v405 = vpop.permute.xlu0 %404
        %v407 = vlaneseq
        %v408 = vshrl.u32 %v407, 7
        %v409 = vsub.s32 0, %v408
        %v410 = vrot.slane %v401, %v409
        %v411 = vsub.f32 %v405, %v410
        %v412 = vand.u32 2147483647, %v411
        %413 = vset.pattern.permute.xlu0 1
        %414 = vperm.xlu0 %413, %v400
        %v415 = vpop.permute.xlu0 %414
        %v417 = vlaneseq
        %v418 = vshrl.u32 %v417, 7
        %v419 = vsub.s32 1, %v418
        %v420 = vrot.slane %v401, %v419
        %v421 = vsub.f32 %v415, %v420
        %v422 = vand.u32 2147483647, %v421
        %v423 = vadd.f32 %v412, %v422
        %424 = vset.pattern.permute.xlu0 2
        %425 = vperm.xlu0 %424, %v400
        %v426 = vpop.permute.xlu0 %425
        %v428 = vlaneseq
        %v429 = vshrl.u32 %v428, 7
        %v430 = vsub.s32 2, %v429
        %v431 = vrot.slane %v401, %v430
        %v432 = vsub.f32 %v426, %v431
        %v433 = vand.u32 2147483647, %v432
        %v434 = vadd.f32 %v423, %v433
        %435 = vset.pattern.permute.xlu0 3
        %436 = vperm.xlu0 %435, %v400
        %v437 = vpop.permute.xlu0 %436
        %v439 = vlaneseq
        %v440 = vshrl.u32 %v439, 7
        %v441 = vsub.s32 3, %v440
        %v442 = vrot.slane %v401, %v441
        %v443 = vsub.f32 %v437, %v442
        %v444 = vand.u32 2147483647, %v443
        %v445 = vadd.f32 %v434, %v444
        %v446 = vmul.f32 %v400, 0.5
        %448 = vrot.lane.b32.xlu0 %v446, 126
        %v449 = vpop.permute.xlu0 %448
        %v451 = vsub.f32 %v400, %v449
        %v452 = vadd.f32 %v400, %v449
        %v453 = vmul.f32 %v401, 0.5
        %v455 = vrot.slane %v453, 2
        %v457 = vsub.f32 %v401, %v455
        %v458 = vadd.f32 %v401, %v455
        %459 = vrot.lane.b32.xlu0 %v400, 127
        %v460 = vpop.permute.xlu0 %459
        %v462 = vmul.f32 %v400, %v460
        %v464 = vrot.slane %v401, 1
        %v466 = vmul.f32 %v401, %v464
        %468 = vset.pattern.permute.xlu0 0
        %469 = vperm.xlu0 %468, %v452
        %v470 = vpop.permute.xlu0 %469
        %v472 = vlaneseq
        %v473 = vshrl.u32 %v472, 7
        %v474 = vsub.s32 0, %v473
        %v475 = vrot.slane %v458, %v474
        %v476 = vmin.f32 %v470, %v475
        %478 = vset.pattern.permute.xlu0 0
        %479 = vperm.xlu0 %478, %v451
        %v480 = vpop.permute.xlu0 %479
        %v482 = vlaneseq
        %v483 = vshrl.u32 %v482, 7
        %v484 = vsub.s32 0, %v483
        %v485 = vrot.slane %v457, %v484
        %v486 = vmax.f32 %v480, %v485
        %v487 = vsub.f32 %v476, %v486
        %v488 = vmax.f32 %v487, 0.0
        %489 = vset.pattern.permute.xlu0 1
        %490 = vperm.xlu0 %489, %v452
        %v491 = vpop.permute.xlu0 %490
        %v493 = vlaneseq
        %v494 = vshrl.u32 %v493, 7
        %v495 = vsub.s32 1, %v494
        %v496 = vrot.slane %v458, %v495
        %v497 = vmin.f32 %v491, %v496
        %498 = vset.pattern.permute.xlu0 1
        %499 = vperm.xlu0 %498, %v451
        %v500 = vpop.permute.xlu0 %499
        %v502 = vlaneseq
        %v503 = vshrl.u32 %v502, 7
        %v504 = vsub.s32 1, %v503
        %v505 = vrot.slane %v457, %v504
        %v506 = vmax.f32 %v500, %v505
        %v507 = vsub.f32 %v497, %v506
        %v508 = vmax.f32 %v507, 0.0
        %v509 = vmul.f32 %v488, %v508
        %511 = vset.pattern.permute.xlu0 2
        %512 = vperm.xlu0 %511, %v462
        %v513 = vpop.permute.xlu0 %512
        %v515 = vlaneseq
        %v516 = vshrl.u32 %v515, 7
        %v517 = vsub.s32 2, %v516
        %v518 = vrot.slane %v466, %v517
        %v519 = vadd.f32 %v513, %v518
        %v520 = vsub.f32 %v519, %v509
        %v521 = vadd.f32 %v520, 1e-08
        %v522 = vmax.f32 %v470, %v475
        %v523 = vmin.f32 %v480, %v485
        %v524 = vsub.f32 %v522, %v523
        %v525 = vmax.f32 %v491, %v496
        %v526 = vmin.f32 %v500, %v505
        %v527 = vsub.f32 %v525, %v526
        %v528 = vmul.f32 %v524, %v527
        %v529 = vadd.f32 %v528, 1e-08
        %v530 = vrcp.pop %v521
        %v531 = vrcp.pop %v529
        %v532 = vmul.f32 %v509, %v530
        %v533 = vsub.f32 %v532, 1.0
        %v534 = vmul.f32 %v521, %v531
        %v535 = vadd.f32 %v533, %v534
        %v536 = vmul.f32 %v445, 5.0
        %v537 = vadd.f32 %v536, %v399
        %v538 = vmul.f32 %v535, 2.0
        %v539 = vsub.f32 %v537, %v538
        %540 = vst [vmem:[%s284] sm:$0xff] %v539
        %s541 = sand.u32 %s151, 1
        %s542 = scalar_lea.sflag [#allocation4], %s541
        %s543 = sand.u32 %s151, 1
        %s544 = smul.addr %s543, 8
        %s545 = scalar_lea.vmem [#allocation5], %s544
        // Predicated region
        $region41: #{tpu_custom_call.1} parent=35 // pred_check
          %p546 = pneg %p161
        $region42: #{tpu_custom_call.1} parent=35 // pred_check_branch
          %548 = sbr.rel (%p546) target = $region44
        $region43: #{tpu_custom_call.1} parent=35 // pred_region
          %s550 = ssub.s32 128, 128
          %551 = vsyncadd %s542, %s550
          %s552 = sadd.s32 %s26, %s25
          %s553 = smul.addr %s552, 128
          %s554 = scalar_lea.hbm %s4, %s553
          %s556 = sshll.u32 %s545, 4
          %s557 = int_to_ptr.vmem [resolvable:$true] %s556
          %559 = dma.vmem_to_hbm [thread:$0]  %s557, 128, %s554, %s542
        $region44: #{tpu_custom_call.1} parent=35 // pred_fallthru
          _
      $region36: #{tpu_custom_call.1} parent=5 // pred_fallthru
        _
      %p560 = scmp.le.s32.totalorder 2, %s16
      // Predicated region
      $region45: #{tpu_custom_call.1} parent=5 // pred_check
        %p561 = pneg %p560
      $region46: #{tpu_custom_call.1} parent=5 // pred_check_branch
        %563 = sbr.rel (%p561) target = $region48
      $region47: #{tpu_custom_call.1} parent=5 // pred_region
        %s564 = ssub.s32 %s16, 2
        // Predicated region
        $region49: #{tpu_custom_call.1} parent=47 // pred_check
          %p565 = pneg %p167
        $region50: #{tpu_custom_call.1} parent=47 // pred_check_branch
          %567 = sbr.rel (%p565) target = $region52
        $region51: #{tpu_custom_call.1} parent=47 // pred_region
          %s568 = sand.u32 %s152, 1
          %s569 = scalar_lea.sflag [#allocation4], %s568
          %s570 = sand.u32 %s152, 1
          %s571 = smul.addr %s570, 8
          %s572 = scalar_lea.vmem [#allocation5], %s571
          %573 = dma.done %s569, 128
        $region52: #{tpu_custom_call.1} parent=47 // pred_fallthru
          _
      $region48: #{tpu_custom_call.1} parent=5 // pred_fallthru
        _
    $region6: #{tpu_custom_call.1} parent=1 // loop_footer
      %s20 = sadd.s32 1, %s16
    $region7: #{tpu_custom_call.1} parent=1 // loop_footer_branch
      %15 = sbr.rel target = $region3
    $region8: #{tpu_custom_call.1} parent=1 // loop_exit
      _
    %574 = vsyncpa [#allocation3], 1
    %s575 = scalar_lea.sflag [#allocation3], 1
    %576 = vsyncpa %s575, 1
    %577 = vsyncpa [#allocation4], 1
    %s578 = scalar_lea.sflag [#allocation4], 1
    %579 = vsyncpa %s578, 1

</llo_original>
